<compile_context>
chip_gen: v7x
topology: tpu7x:2x2x1
jax: 0.10.0
libtpu: 0.0.40
codegen_flags: <defaults>
</compile_context>

<pallas_src>
import functools

import jax
import jax.numpy as jnp
from jax import lax
from jax.experimental import pallas as pl
from jax.experimental.pallas import tpu as pltpu


def _round_up(x, m):
    return ((x + m - 1) // m) * m


def _vmem_capacity_bytes():
    """Physical VMEM per TensorCore; conservative 64 MiB (v7x) if unknown."""
    try:
        cap = int(pltpu.get_tpu_info().vmem_capacity_bytes)
        if cap > 0:
            return cap
    except Exception:
        pass
    return 64 * 1024 * 1024


def _choose_tiling(rows, cols, elem_bytes):
    """Pick (tm, tn, kt, vmem_limit). Never pads the inputs in HBM."""
    # dtype-dependent sublane minimum: 8 (f32) / 16 (bf16) / 32 (int8/fp8).
    sub = max(8, 32 // elem_bytes)

    # 2 inputs x 2 pipeline buffers = half the scoped limit; the other half
    # covers accumulator scratch (<= 2 MiB), outputs and compiler scratch.
    vmem_limit = min(_vmem_capacity_bytes() // 2, 64 * 1024 * 1024)
    tile_bytes = vmem_limit // 8
    TM_CAP = 1024          # 4 f32 accumulators pad to 512 B/row -> <= 2 MiB

    row_bytes = max(1, cols * elem_bytes)
    tm_full = (tile_bytes // row_bytes) // sub * sub
    if tm_full >= sub:
        # Full-width column blocks: fully contiguous DMA, no reduction loop.
        tn, kt = cols, 1
        tm = min(tm_full, TM_CAP)
    else:
        # Very large H*W: split the column (reduction) axis, lane-aligned.
        tm = min(TM_CAP, 256)
        tn = max(128, (tile_bytes // (tm * elem_bytes)) // 128 * 128)
        kt = pl.cdiv(cols, tn)

    if rows < sub:
        tm = rows                                # full-dim block, always legal
    else:
        tm = min(tm, (rows // sub) * sub)        # first blocks fully in-bounds
        if rows >= 2 * sub:
            # Keep >= 2 row blocks so v7x's two TensorCores both get work.
            tm = min(tm, _round_up(pl.cdiv(rows, 2), sub))
        tm = max(tm, sub)
    return tm, tn, kt, vmem_limit


def _loss_kernel(p_ref, t_ref, sq_ref, cos_ref,
                 ss_acc, pp_acc, tt_acc, pt_acc,
                 *, tm, tn, rows, cols, eps):
    i = pl.program_id(0)        # row block  (parallel)
    j = pl.program_id(1)        # col block  (reduction axis, last)

    @pl.when(j == 0)
    def _init():
        ss_acc[...] = jnp.zeros_like(ss_acc)
        pp_acc[...] = jnp.zeros_like(pp_acc)
        tt_acc[...] = jnp.zeros_like(tt_acc)
        pt_acc[...] = jnp.zeros_like(pt_acc)

    p = p_ref[...].astype(jnp.float32)
    t = t_ref[...].astype(jnp.float32)

    def _accum(pv, tv):
        d = pv - tv
        # Direct (p - t)^2 accumulation avoids catastrophic cancellation of
        # the pp - 2pt + tt identity when pred ~= target.
        ss_acc[...] += jnp.sum(d * d, axis=1, keepdims=True)
        pp_acc[...] += jnp.sum(pv * pv, axis=1, keepdims=True)
        tt_acc[...] += jnp.sum(tv * tv, axis=1, keepdims=True)
        pt_acc[...] += jnp.sum(pv * tv, axis=1, keepdims=True)

    if cols % tn == 0:
        # No ragged column block anywhere: interior fast path only.
        _accum(p, t)
    else:
        last_j = pl.num_programs(1) - 1

        @pl.when(j != last_j)
        def _interior():
            _accum(p, t)

        @pl.when(j == last_j)
        def _edge():
            col_ids = lax.broadcasted_iota(jnp.int32, (tm, tn), 1) + j * tn
            cmask = col_ids < cols
            _accum(jnp.where(cmask, p, 0.0), jnp.where(cmask, t, 0.0))

    @pl.when(j == pl.num_programs(1) - 1)
    def _finalize():
        ss = ss_acc[...]
        pp = pp_acc[...]
        tt = tt_acc[...]
        pt = pt_acc[...]

        # PyTorch F.cosine_similarity semantics: clamp each norm separately.
        epsf = jnp.float32(eps)
        denom = jnp.maximum(jnp.sqrt(pp), epsf) * jnp.maximum(jnp.sqrt(tt), epsf)
        one_minus_cos = 1.0 - pt / denom

        if rows % tm != 0:
            # Rows that exist only because the last row block overhangs the
            # array: select (not multiply) so NaN/Inf garbage cannot leak.
            row_ids = lax.broadcasted_iota(jnp.int32, (tm, 1), 0) + i * tm
            valid = row_ids < rows
            ss = jnp.where(valid, ss, 0.0)
            one_minus_cos = jnp.where(valid, one_minus_cos, 0.0)

        sq_ref[...] = jnp.full((1, 1, 128), jnp.sum(ss), dtype=jnp.float32)
        cos_ref[...] = jnp.full((1, 1, 128), jnp.sum(one_minus_cos),
                                dtype=jnp.float32)


def _loss_jax(p2, t2, gamma, lmd, eps):
    """Pure-JAX path for tiny / sub-lane-width problems."""
    p = p2.astype(jnp.float32)
    t = t2.astype(jnp.float32)
    mse = jnp.mean((p - t) ** 2)
    pp = jnp.sum(p * p, axis=1)
    tt = jnp.sum(t * t, axis=1)
    pt = jnp.sum(p * t, axis=1)
    denom = jnp.maximum(jnp.sqrt(pp), eps) * jnp.maximum(jnp.sqrt(tt), eps)
    cossim = jnp.mean(1.0 - pt / denom)
    return jnp.float32(lmd) * mse + jnp.float32(gamma) * cossim


def mse_and_cosine_similarity_loss(pred, target, *, gamma=1.0, lmd=1.0,
                                   eps=1e-8):
    """pred, target: NCHW arrays of identical shape. Returns scalar f32 loss."""
    assert pred.shape == target.shape
    n, c, h, w = pred.shape
    rows = n * c
    cols = h * w

    p2 = pred.reshape(rows, cols)
    t2 = target.reshape(rows, cols)

    if cols < 128:
        # Sub-lane-width rows: launch/step overhead + masked vregs make the
        # Pallas path strictly worse than fused XLA.
        return _loss_jax(p2, t2, gamma, lmd, eps)

    elem_bytes = jnp.dtype(pred.dtype).itemsize
    tm, tn, kt, vmem_limit = _choose_tiling(rows, cols, elem_bytes)
    row_blocks = pl.cdiv(rows, tm)

    kernel = functools.partial(_loss_kernel, tm=tm, tn=tn, rows=rows,
                               cols=cols, eps=eps)

    sq_parts, cos_parts = pl.pallas_call(
        kernel,
        out_shape=(
            jax.ShapeDtypeStruct((row_blocks, 1, 128), jnp.float32),
            jax.ShapeDtypeStruct((row_blocks, 1, 128), jnp.float32),
        ),
        grid_spec=pltpu.PrefetchScalarGridSpec(
            num_scalar_prefetch=0,
            grid=(row_blocks, kt),
            in_specs=[
                pl.BlockSpec((tm, tn), lambda i, j: (i, j)),
                pl.BlockSpec((tm, tn), lambda i, j: (i, j)),
            ],
            out_specs=[
                pl.BlockSpec((1, 1, 128), lambda i, j: (i, 0, 0)),
                pl.BlockSpec((1, 1, 128), lambda i, j: (i, 0, 0)),
            ],
            scratch_shapes=[
                pltpu.VMEM((tm, 1), jnp.float32),   # sum((p-t)^2)
                pltpu.VMEM((tm, 1), jnp.float32),   # sum(p*p)
                pltpu.VMEM((tm, 1), jnp.float32),   # sum(t*t)
                pltpu.VMEM((tm, 1), jnp.float32),   # sum(p*t)
            ],
        ),
        compiler_params=pltpu.CompilerParams(
            dimension_semantics=("parallel", "arbitrary"),
            vmem_limit_bytes=vmem_limit,
        ),
    )(p2, t2)

    # Tiny final reduction (one f32 per row block) in plain JAX — keeps the
    # grid fully parallel (no serial cross-grid scalar accumulator).
    mse = jnp.sum(sq_parts[:, 0, 0]) / jnp.float32(rows * cols)
    cossim = jnp.sum(cos_parts[:, 0, 0]) / jnp.float32(rows)
    return jnp.float32(lmd) * mse + jnp.float32(gamma) * cossim


def _reference(pred, target, gamma=1.0, lmd=1.0, eps=1e-8):
    """Pure-JAX reference mirroring the PyTorch module semantics."""
    _, _, h, w = pred.shape
    p = pred.reshape(-1, h * w).astype(jnp.float32)
    t = target.reshape(-1, h * w).astype(jnp.float32)
    mse = jnp.mean((p - t) ** 2)
    dot = jnp.sum(p * t, axis=1)
    denom = (jnp.maximum(jnp.linalg.norm(p, axis=1), eps)
             * jnp.maximum(jnp.linalg.norm(t, axis=1), eps))
    cossim = jnp.mean(1.0 - dot / denom)
    return lmd * mse + gamma * cossim


if __name__ == "__main__":
    key = jax.random.PRNGKey(0)
    k1, k2, k3, k4 = jax.random.split(key, 4)

    # Canonical small NCHW case: batch=2, channels=4, spatial=16x16.
    pred = jax.random.normal(k1, (2, 4, 16, 16), dtype=jnp.float32)
    target = jax.random.normal(k2, (2, 4, 16, 16), dtype=jnp.float32)
    loss = jax.block_until_ready(
        mse_and_cosine_similarity_loss(pred, target, gamma=1.0, lmd=1.0))
    ref = _reference(pred, target)
    assert jnp.allclose(loss, ref, rtol=1e-5, atol=1e-5), (loss, ref)

    # Non-tile-aligned case (ragged row blocks, non-128 column width) to
    # exercise the in-kernel masking path that replaced wrapper-side jnp.pad.
    pred2 = jax.random.normal(k3, (3, 4, 16, 20), dtype=jnp.float32)
    target2 = jax.random.normal(k4, (3, 4, 16, 20), dtype=jnp.float32)
    loss2 = jax.block_until_ready(
        mse_and_cosine_similarity_loss(pred2, target2, gamma=1.0, lmd=1.0))
    ref2 = _reference(pred2, target2)
    assert jnp.allclose(loss2, ref2, rtol=1e-5, atol=1e-5), (loss2, ref2)

    print("KERNEL_OK")
</pallas_src>

<mosaic_0001>
module attributes {stable_mosaic.version = 11 : i64} {
  func.func @_loss_kernel(%arg0: i32, %arg1: i32, %arg2: memref<8x256xf32, #tpu.memory_space<vmem>>, %arg3: memref<8x256xf32, #tpu.memory_space<vmem>>, %arg4: memref<1x1x128xf32, #tpu.memory_space<vmem>>, %arg5: memref<1x1x128xf32, #tpu.memory_space<vmem>>, %arg6: memref<8x1xf32, #tpu.memory_space<vmem>>, %arg7: memref<8x1xf32, #tpu.memory_space<vmem>>, %arg8: memref<8x1xf32, #tpu.memory_space<vmem>>, %arg9: memref<8x1xf32, #tpu.memory_space<vmem>>) attributes {dimension_semantics = [#tpu.dimension_semantics<parallel>, #tpu.dimension_semantics<arbitrary>], iteration_bounds = array<i64: 1, 1>, scalar_prefetch = 0 : i64, scratch_operands = 4 : i64, tpu.core_type = #tpu.core_type<tc>, window_params = [{transform_indices = @transform_0, window_bounds = array<i64: 8, 256>}, {transform_indices = @transform_1, window_bounds = array<i64: 8, 256>}, {transform_indices = @transform_2, window_bounds = array<i64: 1, 1, 128>}, {transform_indices = @transform_3, window_bounds = array<i64: 1, 1, 128>}]} {
    %c0_i32 = arith.constant 0 : i32
    %0 = arith.cmpi eq, %arg1, %c0_i32 : i32
    %1 = arith.extui %0 : i1 to i32
    %c0_i32_0 = arith.constant 0 : i32
    %2 = arith.cmpi ne, %1, %c0_i32_0 : i32
    scf.if %2 {
      %cst_25 = arith.constant 0.000000e+00 : f32
      %33 = vector.broadcast %cst_25 : f32 to vector<8x1xf32>
      %c0_26 = arith.constant 0 : index
      %c0_27 = arith.constant 0 : index
      %34 = vector.load %arg6[%c0_26, %c0_27] : memref<8x1xf32, #tpu.memory_space<vmem>>, vector<8x1xf32>
      tpu.vector_store %arg6[%c0_26, %c0_27], %33 {strides = array<i32>} : memref<8x1xf32, #tpu.memory_space<vmem>>, vector<8x1xf32>,
      %cst_28 = arith.constant 0.000000e+00 : f32
      %35 = vector.broadcast %cst_28 : f32 to vector<8x1xf32>
      %c0_29 = arith.constant 0 : index
      %c0_30 = arith.constant 0 : index
      %36 = vector.load %arg7[%c0_29, %c0_30] : memref<8x1xf32, #tpu.memory_space<vmem>>, vector<8x1xf32>
      tpu.vector_store %arg7[%c0_29, %c0_30], %35 {strides = array<i32>} : memref<8x1xf32, #tpu.memory_space<vmem>>, vector<8x1xf32>,
      %cst_31 = arith.constant 0.000000e+00 : f32
      %37 = vector.broadcast %cst_31 : f32 to vector<8x1xf32>
      %c0_32 = arith.constant 0 : index
      %c0_33 = arith.constant 0 : index
      %38 = vector.load %arg8[%c0_32, %c0_33] : memref<8x1xf32, #tpu.memory_space<vmem>>, vector<8x1xf32>
      tpu.vector_store %arg8[%c0_32, %c0_33], %37 {strides = array<i32>} : memref<8x1xf32, #tpu.memory_space<vmem>>, vector<8x1xf32>,
      %cst_34 = arith.constant 0.000000e+00 : f32
      %39 = vector.broadcast %cst_34 : f32 to vector<8x1xf32>
      %c0_35 = arith.constant 0 : index
      %c0_36 = arith.constant 0 : index
      %40 = vector.load %arg9[%c0_35, %c0_36] : memref<8x1xf32, #tpu.memory_space<vmem>>, vector<8x1xf32>
      tpu.vector_store %arg9[%c0_35, %c0_36], %39 {strides = array<i32>} : memref<8x1xf32, #tpu.memory_space<vmem>>, vector<8x1xf32>,
    } else {
    }
    %c0 = arith.constant 0 : index
    %c0_1 = arith.constant 0 : index
    %3 = vector.load %arg2[%c0, %c0_1] : memref<8x256xf32, #tpu.memory_space<vmem>>, vector<8x256xf32>
    %c0_2 = arith.constant 0 : index
    %c0_3 = arith.constant 0 : index
    %4 = vector.load %arg3[%c0_2, %c0_3] : memref<8x256xf32, #tpu.memory_space<vmem>>, vector<8x256xf32>
    %5 = arith.subf %3, %4 : vector<8x256xf32>
    %c0_4 = arith.constant 0 : index
    %c0_5 = arith.constant 0 : index
    %6 = vector.load %arg6[%c0_4, %c0_5] : memref<8x1xf32, #tpu.memory_space<vmem>>, vector<8x1xf32>
    %7 = arith.mulf %5, %5 : vector<8x256xf32>
    %cst = arith.constant dense<0.000000e+00> : vector<8xf32>
    %8 = vector.multi_reduction <add>, %7, %cst [1] : vector<8x256xf32> to vector<8xf32>
    %9 = vector.shape_cast %8 : vector<8xf32> to vector<8x1xf32>
    %10 = arith.addf %6, %9 : vector<8x1xf32>
    %c0_6 = arith.constant 0 : index
    %c0_7 = arith.constant 0 : index
    %11 = vector.load %arg6[%c0_6, %c0_7] : memref<8x1xf32, #tpu.memory_space<vmem>>, vector<8x1xf32>
    tpu.vector_store %arg6[%c0_6, %c0_7], %10 {strides = array<i32>} : memref<8x1xf32, #tpu.memory_space<vmem>>, vector<8x1xf32>,
    %c0_8 = arith.constant 0 : index
    %c0_9 = arith.constant 0 : index
    %12 = vector.load %arg7[%c0_8, %c0_9] : memref<8x1xf32, #tpu.memory_space<vmem>>, vector<8x1xf32>
    %13 = arith.mulf %3, %3 : vector<8x256xf32>
    %cst_10 = arith.constant dense<0.000000e+00> : vector<8xf32>
    %14 = vector.multi_reduction <add>, %13, %cst_10 [1] : vector<8x256xf32> to vector<8xf32>
    %15 = vector.shape_cast %14 : vector<8xf32> to vector<8x1xf32>
    %16 = arith.addf %12, %15 : vector<8x1xf32>
    %c0_11 = arith.constant 0 : index
    %c0_12 = arith.constant 0 : index
    %17 = vector.load %arg7[%c0_11, %c0_12] : memref<8x1xf32, #tpu.memory_space<vmem>>, vector<8x1xf32>
    tpu.vector_store %arg7[%c0_11, %c0_12], %16 {strides = array<i32>} : memref<8x1xf32, #tpu.memory_space<vmem>>, vector<8x1xf32>,
    %c0_13 = arith.constant 0 : index
    %c0_14 = arith.constant 0 : index
    %18 = vector.load %arg8[%c0_13, %c0_14] : memref<8x1xf32, #tpu.memory_space<vmem>>, vector<8x1xf32>
    %19 = arith.mulf %4, %4 : vector<8x256xf32>
    %cst_15 = arith.constant dense<0.000000e+00> : vector<8xf32>
    %20 = vector.multi_reduction <add>, %19, %cst_15 [1] : vector<8x256xf32> to vector<8xf32>
    %21 = vector.shape_cast %20 : vector<8xf32> to vector<8x1xf32>
    %22 = arith.addf %18, %21 : vector<8x1xf32>
    %c0_16 = arith.constant 0 : index
    %c0_17 = arith.constant 0 : index
    %23 = vector.load %arg8[%c0_16, %c0_17] : memref<8x1xf32, #tpu.memory_space<vmem>>, vector<8x1xf32>
    tpu.vector_store %arg8[%c0_16, %c0_17], %22 {strides = array<i32>} : memref<8x1xf32, #tpu.memory_space<vmem>>, vector<8x1xf32>,
    %c0_18 = arith.constant 0 : index
    %c0_19 = arith.constant 0 : index
    %24 = vector.load %arg9[%c0_18, %c0_19] : memref<8x1xf32, #tpu.memory_space<vmem>>, vector<8x1xf32>
    %25 = arith.mulf %3, %4 : vector<8x256xf32>
    %cst_20 = arith.constant dense<0.000000e+00> : vector<8xf32>
    %26 = vector.multi_reduction <add>, %25, %cst_20 [1] : vector<8x256xf32> to vector<8xf32>
    %27 = vector.shape_cast %26 : vector<8xf32> to vector<8x1xf32>
    %28 = arith.addf %24, %27 : vector<8x1xf32>
    %c0_21 = arith.constant 0 : index
    %c0_22 = arith.constant 0 : index
    %29 = vector.load %arg9[%c0_21, %c0_22] : memref<8x1xf32, #tpu.memory_space<vmem>>, vector<8x1xf32>
    tpu.vector_store %arg9[%c0_21, %c0_22], %28 {strides = array<i32>} : memref<8x1xf32, #tpu.memory_space<vmem>>, vector<8x1xf32>,
    %c0_i32_23 = arith.constant 0 : i32
    %30 = arith.cmpi eq, %arg1, %c0_i32_23 : i32
    %31 = arith.extui %30 : i1 to i32
    %c0_i32_24 = arith.constant 0 : i32
    %32 = arith.cmpi ne, %31, %c0_i32_24 : i32
    scf.if %32 {
      %c0_25 = arith.constant 0 : index
      %c0_26 = arith.constant 0 : index
      %33 = vector.load %arg6[%c0_25, %c0_26] : memref<8x1xf32, #tpu.memory_space<vmem>>, vector<8x1xf32>
      %c0_27 = arith.constant 0 : index
      %c0_28 = arith.constant 0 : index
      %34 = vector.load %arg7[%c0_27, %c0_28] : memref<8x1xf32, #tpu.memory_space<vmem>>, vector<8x1xf32>
      %c0_29 = arith.constant 0 : index
      %c0_30 = arith.constant 0 : index
      %35 = vector.load %arg8[%c0_29, %c0_30] : memref<8x1xf32, #tpu.memory_space<vmem>>, vector<8x1xf32>
      %c0_31 = arith.constant 0 : index
      %c0_32 = arith.constant 0 : index
      %36 = vector.load %arg9[%c0_31, %c0_32] : memref<8x1xf32, #tpu.memory_space<vmem>>, vector<8x1xf32>
      %37 = math.sqrt %34 : vector<8x1xf32>
      %cst_33 = arith.constant 9.99999993E-9 : f32
      %38 = vector.broadcast %cst_33 : f32 to vector<8x1xf32>
      %39 = arith.maximumf %37, %38 : vector<8x1xf32>
      %40 = math.sqrt %35 : vector<8x1xf32>
      %cst_34 = arith.constant 9.99999993E-9 : f32
      %41 = vector.broadcast %cst_34 : f32 to vector<8x1xf32>
      %42 = arith.maximumf %40, %41 : vector<8x1xf32>
      %43 = arith.mulf %39, %42 : vector<8x1xf32>
      %44 = arith.divf %36, %43 : vector<8x1xf32>
      %cst_35 = arith.constant 1.000000e+00 : f32
      %45 = vector.broadcast %cst_35 : f32 to vector<8x1xf32>
      %46 = arith.subf %45, %44 : vector<8x1xf32>
      %47 = vector.shape_cast %33 : vector<8x1xf32> to vector<1x8x1xf32>
      %cst_36 = arith.constant dense<0.000000e+00> : vector<1xf32>
      %48 = vector.multi_reduction <add>, %47, %cst_36 [1, 2] : vector<1x8x1xf32> to vector<1xf32>
      %49 = vector.shape_cast %48 : vector<1xf32> to vector<1x1x1xf32>
      %50 = vector.extract %49[0, 0, 0] : f32 from vector<1x1x1xf32>
      %51 = vector.broadcast %50 : f32 to vector<1x1x128xf32>
      %c0_37 = arith.constant 0 : index
      %c0_38 = arith.constant 0 : index
      %c0_39 = arith.constant 0 : index
      %52 = vector.load %arg4[%c0_37, %c0_38, %c0_39] : memref<1x1x128xf32, #tpu.memory_space<vmem>>, vector<1x1x128xf32>
      tpu.vector_store %arg4[%c0_37, %c0_38, %c0_39], %51 {strides = array<i32>} : memref<1x1x128xf32, #tpu.memory_space<vmem>>, vector<1x1x128xf32>,
      %53 = vector.shape_cast %46 : vector<8x1xf32> to vector<1x8x1xf32>
      %cst_40 = arith.constant dense<0.000000e+00> : vector<1xf32>
      %54 = vector.multi_reduction <add>, %53, %cst_40 [1, 2] : vector<1x8x1xf32> to vector<1xf32>
      %55 = vector.shape_cast %54 : vector<1xf32> to vector<1x1x1xf32>
      %56 = vector.extract %55[0, 0, 0] : f32 from vector<1x1x1xf32>
      %57 = vector.broadcast %56 : f32 to vector<1x1x128xf32>
      %c0_41 = arith.constant 0 : index
      %c0_42 = arith.constant 0 : index
      %c0_43 = arith.constant 0 : index
      %58 = vector.load %arg5[%c0_41, %c0_42, %c0_43] : memref<1x1x128xf32, #tpu.memory_space<vmem>>, vector<1x1x128xf32>
      tpu.vector_store %arg5[%c0_41, %c0_42, %c0_43], %57 {strides = array<i32>} : memref<1x1x128xf32, #tpu.memory_space<vmem>>, vector<1x1x128xf32>,
    } else {
    }
    return
  }
  func.func @transform_0(%arg0: i32, %arg1: i32) -> (i32, i32) {
    %c0_i32 = arith.constant 0 : i32
    return %arg0, %arg1 : i32, i32
  }
  func.func @transform_1(%arg0: i32, %arg1: i32) -> (i32, i32) {
    %c0_i32 = arith.constant 0 : i32
    return %arg0, %arg1 : i32, i32
  }
  func.func @transform_2(%arg0: i32, %arg1: i32) -> (i32, i32, i32) {
    %c0_i32 = arith.constant 0 : i32
    %c0_i32_0 = arith.constant 0 : i32
    %c0_i32_1 = arith.constant 0 : i32
    return %arg0, %c0_i32, %c0_i32_0 : i32, i32, i32
  }
  func.func @transform_3(%arg0: i32, %arg1: i32) -> (i32, i32, i32) {
    %c0_i32 = arith.constant 0 : i32
    %c0_i32_0 = arith.constant 0 : i32
    %c0_i32_1 = arith.constant 0 : i32
    return %arg0, %c0_i32, %c0_i32_0 : i32, i32, i32
  }
}

</mosaic_0001>

<llo_original>
// kernel: tpu_custom_call.1
$region0: #{tpu_custom_call.1}
  #allocation0 [shape = 'u32[]', space=smem, size = 0x4, offset = 0x4, fixed_abs, tag = 'smem constant byte address 0x4 - core index']
  #allocation1 [shape = 'u32[144,128]{1,0:T(1,128)}', space=vmem, size = 0x12000, scoped, tag = 'internal scratch']
  #allocation2 [shape = 'f32[8,1]{1,0:T(8,128)}', space=vmem, size = 0x1000, scoped, tag = 'scratch operand']
  #allocation3 [shape = 'f32[8,1]{1,0:T(8,128)}', space=vmem, size = 0x1000, scoped, tag = 'scratch operand']
  #allocation4 [shape = 'f32[8,1]{1,0:T(8,128)}', space=vmem, size = 0x1000, scoped, tag = 'scratch operand']
  #allocation5 [shape = 'f32[8,1]{1,0:T(8,128)}', space=vmem, size = 0x1000, scoped, tag = 'scratch operand']
  %s0 = inlined_call_operand.hbm [shape: f32[8,256], index: 0, kind: input, shape index: {}]
  %s1 = inlined_call_operand.hbm [shape: f32[8,256], index: 1, kind: input, shape index: {}]
  %s2 = inlined_call_operand.hbm [shape: f32[1,1,128], index: 2, kind: output, shape index: {0}]
  %s3 = inlined_call_operand.hbm [shape: f32[1,1,128], index: 3, kind: output, shape index: {1}]
  %4 = xla_tuple %s2, %s3
  %s5 = sld [smem:[#allocation0]]
  $region42: #{tpu_custom_call.1} parent=0
    _
  %s7 = ssub.s32 1, %s5
  %s8 = scalar_select 0, %s7, %s5
  $region1: #{tpu_custom_call.1} parent=0
    #allocation6 [shape = 'u8[8192]{0}', space=vmem, size = 0x2000, scoped, tag = 'input window, operand 0, single buffered']
    #allocation7 [shape = 's32[1]{0}', space=sflag, size = 0x4, scoped, tag = 'scoped memory for tpu_custom_call.1']
    #allocation8 [shape = 's32[1]{0}', space=sflag, size = 0x4, scoped, tag = 'scoped memory for tpu_custom_call.1']
    #allocation9 [shape = 'u8[8192]{0}', space=vmem, size = 0x2000, scoped, tag = 'input window, operand 1, single buffered']
    #allocation10 [shape = 's32[1]{0}', space=sflag, size = 0x4, scoped, tag = 'scoped memory for tpu_custom_call.1']
    #allocation11 [shape = 'u8[512]{0}', space=vmem, size = 0x400, scoped, tag = 'output window, operand 0, single buffered']
    #allocation12 [shape = 'u8[512]{0}', space=vmem, size = 0x400, scoped, tag = 'output window, operand 1, single buffered']
    #allocation13 [shape = 's32[1]{0}', space=sflag, size = 0x4, scoped, tag = 'scoped memory for tpu_custom_call.1']
    %9 = vsyncpa [#allocation7], 0
    %10 = vsyncpa [#allocation10], 0
    %11 = vsyncpa [#allocation8], 0
    %12 = vsyncpa [#allocation13], 0
    // Predicated region
    $region2: #{tpu_custom_call.1} parent=1 // pred_check
      _
    $region3: #{tpu_custom_call.1} parent=1 // pred_check_branch
      %14 = sbr.rel (0) target = $region5
    $region4: #{tpu_custom_call.1} parent=1 // pred_region
      %s16 = ssub.s32 256, 256
      %17 = vsyncadd [#allocation7], %s16
      %s19 = sshll.u32 [#allocation6], 4
      %s20 = int_to_ptr.vmem [resolvable:$true] %s19
      %22 = dma.hbm_to_vmem [thread:$0]  %s0, 256, %s20, [#allocation7]
    $region5: #{tpu_custom_call.1} parent=1 // pred_fallthru
      _
    // Predicated region
    $region6: #{tpu_custom_call.1} parent=1 // pred_check
      _
    $region7: #{tpu_custom_call.1} parent=1 // pred_check_branch
      %24 = sbr.rel (0) target = $region9
    $region8: #{tpu_custom_call.1} parent=1 // pred_region
      %s26 = ssub.s32 256, 256
      %27 = vsyncadd [#allocation10], %s26
      %s29 = sshll.u32 [#allocation9], 4
      %s30 = int_to_ptr.vmem [resolvable:$true] %s29
      %32 = dma.hbm_to_vmem [thread:$0]  %s1, 256, %s30, [#allocation10]
    $region9: #{tpu_custom_call.1} parent=1 // pred_fallthru
      _
    // Predicated region
    $region10: #{tpu_custom_call.1} parent=1 // pred_check
      _
    $region11: #{tpu_custom_call.1} parent=1 // pred_check_branch
      %34 = sbr.rel (0) target = $region13
    $region12: #{tpu_custom_call.1} parent=1 // pred_region
      %35 = dma.done [#allocation7], 256
    $region13: #{tpu_custom_call.1} parent=1 // pred_fallthru
      _
    // Predicated region
    $region14: #{tpu_custom_call.1} parent=1 // pred_check
      _
    $region15: #{tpu_custom_call.1} parent=1 // pred_check_branch
      %37 = sbr.rel (0) target = $region17
    $region16: #{tpu_custom_call.1} parent=1 // pred_region
      %38 = dma.done [#allocation10], 256
    $region17: #{tpu_custom_call.1} parent=1 // pred_fallthru
      _
    %p39 = scmp.eq.s32.totalorder 0, 0
    // Predicated region
    $region18: #{tpu_custom_call.1} parent=1 // pred_check
      %p40 = pneg %p39
    $region19: #{tpu_custom_call.1} parent=1 // pred_check_branch
      %42 = sbr.rel (%p40) target = $region21
    $region20: #{tpu_custom_call.1} parent=1 // pred_region
      %vm43 = vcmask 7168
      %44 = vst.msk [vmem:[#allocation2] sm:$0xff] %vm43, 0.0
      %45 = vst.msk [vmem:[#allocation3] sm:$0xff] %vm43, 0.0
      %46 = vst.msk [vmem:[#allocation4] sm:$0xff] %vm43, 0.0
      %47 = vst.msk [vmem:[#allocation5] sm:$0xff] %vm43, 0.0
    $region21: #{tpu_custom_call.1} parent=1 // pred_fallthru
      _
    %v48 = vld [vmem:[#allocation6] sm:$0xff]
    %v49 = vld [vmem:[#allocation6 + $0x8] sm:$0xff]
    %v50 = vld [vmem:[#allocation9] sm:$0xff]
    %v51 = vld [vmem:[#allocation9 + $0x8] sm:$0xff]
    %v52 = vsub.f32 %v48, %v50
    %v53 = vsub.f32 %v49, %v51
    %v54 = vld [vmem:[#allocation2] sm:$0xff]
    %v55 = vmul.f32 %v52, %v52
    %v56 = vmul.f32 %v53, %v53
    %v57 = vadd.f32 %v55, %v56
    %58 = vadd.xlane.f32.xlu0 %v57
    %v59 = vpop.xlane.xlu0 %58
    %v60 = vadd.f32 %v54, %v59
    %vm61 = vcmask 7168
    %62 = vst.msk [vmem:[#allocation2] sm:$0xff] %vm61, %v60
    %v63 = vld [vmem:[#allocation3] sm:$0xff]
    %v64 = vmul.f32 %v48, %v48
    %v65 = vmul.f32 %v49, %v49
    %v66 = vadd.f32 %v64, %v65
    %67 = vadd.xlane.f32.xlu0 %v66
    %v68 = vpop.xlane.xlu0 %67
    %v69 = vadd.f32 %v63, %v68
    %70 = vst.msk [vmem:[#allocation3] sm:$0xff] %vm61, %v69
    %v71 = vld [vmem:[#allocation4] sm:$0xff]
    %v72 = vmul.f32 %v50, %v50
    %v73 = vmul.f32 %v51, %v51
    %v74 = vadd.f32 %v72, %v73
    %75 = vadd.xlane.f32.xlu0 %v74
    %v76 = vpop.xlane.xlu0 %75
    %v77 = vadd.f32 %v71, %v76
    %78 = vst.msk [vmem:[#allocation4] sm:$0xff] %vm61, %v77
    %v79 = vld [vmem:[#allocation5] sm:$0xff]
    %v80 = vmul.f32 %v48, %v50
    %v81 = vmul.f32 %v49, %v51
    %v82 = vadd.f32 %v80, %v81
    %83 = vadd.xlane.f32.xlu0 %v82
    %v84 = vpop.xlane.xlu0 %83
    %v85 = vadd.f32 %v79, %v84
    %86 = vst.msk [vmem:[#allocation5] sm:$0xff] %vm61, %v85
    // Predicated region
    $region22: #{tpu_custom_call.1} parent=1 // pred_check
      %p87 = pneg %p39
    $region23: #{tpu_custom_call.1} parent=1 // pred_check_branch
      %89 = sbr.rel (%p87) target = $region25
    $region24: #{tpu_custom_call.1} parent=1 // pred_region
      %v90 = vld [vmem:[#allocation2] sm:$0xff]
      %v91 = vld [vmem:[#allocation3] sm:$0xff]
      %v92 = vld [vmem:[#allocation4] sm:$0xff]
      %v93 = vld [vmem:[#allocation5] sm:$0xff]
      %v94 = vrsqrt.pop %v91
      %v95 = vmul.f32 %v91, %v94
      %vm96 = vcmp.eq.f32.partialorder %v91, inf
      %v97 = vsel %vm96, %v91, %v95
      %vm98 = vcmp.eq.f32.partialorder %v91, 0.0
      %v99 = vand.u32 %v91, 2147483648
      %v100 = vsel %vm98, %v99, %v97
      %v101 = vmax.f32 %v100, 1e-08
      %v102 = vrsqrt.pop %v92
      %v103 = vmul.f32 %v92, %v102
      %vm104 = vcmp.eq.f32.partialorder %v92, inf
      %v105 = vsel %vm104, %v92, %v103
      %vm106 = vcmp.eq.f32.partialorder %v92, 0.0
      %v107 = vand.u32 %v92, 2147483648
      %v108 = vsel %vm106, %v107, %v105
      %v109 = vmax.f32 %v108, 1e-08
      %v110 = vmul.f32 %v101, %v109
      %v111 = vrcp.pop %v110
      %v112 = vmul.f32 %v93, %v111
      %v113 = vsub.f32 1.0, %v112
      %v114 = vsel %vm61, %v90, 0.0
      %115 = vadd.xlane.f32.xlu0 %v114
      %v116 = vpop.xlane.xlu0 %115
      %v117 = vrot.slane %v116, 4
      %v118 = vadd.f32 %v116, %v117
      %v119 = vrot.slane %v118, 2
      %v120 = vadd.f32 %v118, %v119
      %v121 = vrot.slane %v120, 1
      %v122 = vadd.f32 %v120, %v121
      %s123 = vtos %v122
      %v124 = vstv %s123
      %125 = vst [vmem:[#allocation11] sm:$0x1] %v124
      %v126 = vsel %vm61, %v113, 0.0
      %127 = vadd.xlane.f32.xlu0 %v126
      %v128 = vpop.xlane.xlu0 %127
      %v129 = vrot.slane %v128, 4
      %v130 = vadd.f32 %v128, %v129
      %v131 = vrot.slane %v130, 2
      %v132 = vadd.f32 %v130, %v131
      %v133 = vrot.slane %v132, 1
      %v134 = vadd.f32 %v132, %v133
      %s135 = vtos %v134
      %v136 = vstv %s135
      %137 = vst [vmem:[#allocation12] sm:$0x1] %v136
    $region25: #{tpu_custom_call.1} parent=1 // pred_fallthru
      _
    // Predicated region
    $region26: #{tpu_custom_call.1} parent=1 // pred_check
      _
    $region27: #{tpu_custom_call.1} parent=1 // pred_check_branch
      %139 = sbr.rel (0) target = $region29
    $region28: #{tpu_custom_call.1} parent=1 // pred_region
      %s141 = ssub.s32 16, 16
      %142 = vsyncadd [#allocation8], %s141
      %s144 = sshll.u32 [#allocation11], 4
      %s145 = int_to_ptr.vmem [resolvable:$true] %s144
      %147 = dma.vmem_to_hbm [thread:$0]  %s145, 16, %s2, [#allocation8]
    $region29: #{tpu_custom_call.1} parent=1 // pred_fallthru
      _
    // Predicated region
    $region30: #{tpu_custom_call.1} parent=1 // pred_check
      _
    $region31: #{tpu_custom_call.1} parent=1 // pred_check_branch
      %149 = sbr.rel (0) target = $region33
    $region32: #{tpu_custom_call.1} parent=1 // pred_region
      %s151 = ssub.s32 16, 16
      %152 = vsyncadd [#allocation13], %s151
      %s154 = sshll.u32 [#allocation12], 4
      %s155 = int_to_ptr.vmem [resolvable:$true] %s154
      %157 = dma.vmem_to_hbm [thread:$0]  %s155, 16, %s3, [#allocation13]
    $region33: #{tpu_custom_call.1} parent=1 // pred_fallthru
      _
    // Predicated region
    $region34: #{tpu_custom_call.1} parent=1 // pred_check
      _
    $region35: #{tpu_custom_call.1} parent=1 // pred_check_branch
      %159 = sbr.rel (0) target = $region37
    $region36: #{tpu_custom_call.1} parent=1 // pred_region
      %160 = dma.done [#allocation8], 16
    $region37: #{tpu_custom_call.1} parent=1 // pred_fallthru
      _
    // Predicated region
    $region38: #{tpu_custom_call.1} parent=1 // pred_check
      _
    $region39: #{tpu_custom_call.1} parent=1 // pred_check_branch
      %162 = sbr.rel (0) target = $region41
    $region40: #{tpu_custom_call.1} parent=1 // pred_region
      %163 = dma.done [#allocation13], 16
    $region41: #{tpu_custom_call.1} parent=1 // pred_fallthru
      _
    %164 = vsyncpa [#allocation7], 1
    %165 = vsyncpa [#allocation10], 1
    %166 = vsyncpa [#allocation8], 1
    %167 = vsyncpa [#allocation13], 1

</llo_original>
